<compile_context>
chip_gen: v7x
topology: tpu7x:2x2x1
jax: 0.10.0
libtpu: 0.0.40
codegen_flags: <defaults>
</compile_context>

<pallas_src>
import functools

import jax
import jax.numpy as jnp
import numpy as np
from jax import lax
from jax.experimental import pallas as pl
from jax.experimental.pallas import tpu as pltpu


def _self_attention_kernel(x_ref, w_qkv_ref, b_qkv_ref, gamma_ref, o_ref,
                           *, nonlinear, use_gamma, inv_sqrt_dim, D):
    x = x_ref[...]                                    # (Bb, N, L) f32
    Bb, N, L = x.shape

    # Fused q/k/v projection: one (Bb*N, L) x (L, 2D+L) MXU matmul.
    # (reshape only collapses leading dims; last dim stays on lanes -> free)
    x2 = x.reshape(Bb * N, L)
    proj = jnp.dot(x2, w_qkv_ref[...],
                   preferred_element_type=jnp.float32) + b_qkv_ref[...]
    q = proj[:, :D]
    k = proj[:, D:2 * D]
    v = proj[:, 2 * D:]
    if nonlinear:
        q = jnp.tanh(q)
        k = jnp.tanh(k)

    q = q.reshape(Bb, N, D)
    k = k.reshape(Bb, N, D)
    v = v.reshape(Bb, N, L)

    # score = q @ k^T * (1/sqrt(D)) -- contract last dims, no explicit k.T.
    score = lax.dot_general(
        q, k, dimension_numbers=(((2,), (2,)), ((0,), (0,))),
        preferred_element_type=jnp.float32) * inv_sqrt_dim         # (Bb, N, N)

    # softmax over last axis (full row resident in this block). Exact divide:
    # matches the PyTorch reference bit-for-bit-ish (approx reciprocal dropped
    # per correctness feedback; VPU slack makes this free at these shapes).
    score = score - jnp.max(score, axis=-1, keepdims=True)
    e = jnp.exp(score)
    a = e / jnp.sum(e, axis=-1, keepdims=True)

    # context = A @ v   (batched matmul)
    context = lax.dot_general(
        a, v, dimension_numbers=(((2,), (1,)), ((0,), (0,))),
        preferred_element_type=jnp.float32)                        # (Bb, N, L)

    if use_gamma:
        out = gamma_ref[0] * context + x             # gamma: 1-D SMEM scalar
    else:
        out = context
    o_ref[...] = out.astype(o_ref.dtype)


def pack_params(params):
    """One-time parameter packing (do NOT call per forward step).

    params: dict with wq (L,D), bq (1,D), wk (L,D), bk (1,D), wv (L,L),
            bv (1,L), gamma (scalar-ish).
    Returns a dict with the fused qkv weight/bias and a 1-D gamma, which are
    stable buffers fed straight to the kernel.
    """
    w_qkv = jnp.concatenate([params["wq"], params["wk"], params["wv"]], axis=1)  # (L, 2D+L)
    b_qkv = jnp.concatenate([params["bq"], params["bk"], params["bv"]], axis=1)  # (1, 2D+L)
    gamma = jnp.reshape(params["gamma"], (-1,)).astype(jnp.float32)[:1]          # (1,)
    return {"w_qkv": w_qkv, "b_qkv": b_qkv, "gamma": gamma}


def self_attention(x, packed, *, nonlinear=True, use_gamma=True, batch_blocks=1):
    """x: (B, N, L) float32. packed: output of pack_params().

    batch_blocks: number of grid steps over the batch. Keep 1 on v5e/v6e
    (single TensorCore -> extra grid steps are pure overhead); use 2 on v7x so
    both TensorCores get work.
    """
    B, N, L = x.shape
    W = packed["w_qkv"].shape[1]
    D = (W - L) // 2
    assert 2 * D + L == W, "packed w_qkv width must be 2*D + L"
    assert B % batch_blocks == 0, "batch_blocks must divide B"
    Bb = B // batch_blocks
    inv_sqrt_dim = float(1.0 / np.sqrt(D))

    kernel = functools.partial(
        _self_attention_kernel,
        nonlinear=nonlinear, use_gamma=use_gamma, inv_sqrt_dim=inv_sqrt_dim, D=D,
    )

    return pl.pallas_call(
        kernel,
        out_shape=jax.ShapeDtypeStruct((B, N, L), x.dtype),
        grid=(batch_blocks,),
        in_specs=[
            # activations: pipelined per batch block
            pl.BlockSpec((Bb, N, L), lambda b: (b, 0, 0)),
            # packed weights / bias: whole array resident in VMEM once,
            # not double-buffered across grid steps (constant index).
            pl.BlockSpec(memory_space=pltpu.MemorySpace.VMEM),
            pl.BlockSpec(memory_space=pltpu.MemorySpace.VMEM),
            # gamma: 1-D scalar in SMEM (4 bytes, no padded 2-D tile)
            pl.BlockSpec(memory_space=pltpu.MemorySpace.SMEM),
        ],
        out_specs=pl.BlockSpec((Bb, N, L), lambda b: (b, 0, 0)),
        compiler_params=pltpu.CompilerParams(dimension_semantics=("parallel",)),
    )(x, packed["w_qkv"], packed["b_qkv"], packed["gamma"])


def _init_params(key, L, D):
    """Deterministic init mimicking nn.Linear default U(-1/sqrt(fan_in), 1/sqrt(fan_in))."""
    ks = jax.random.split(key, 6)
    bound = 1.0 / np.sqrt(L)
    u = lambda k, shape: jax.random.uniform(k, shape, jnp.float32, -bound, bound)
    return {
        "wq": u(ks[0], (L, D)),   # stored pre-transposed (fan_in, fan_out)
        "bq": u(ks[1], (1, D)),
        "wk": u(ks[2], (L, D)),
        "bk": u(ks[3], (1, D)),
        "wv": u(ks[4], (L, L)),
        "bv": u(ks[5], (1, L)),
        "gamma": jnp.zeros((1,), jnp.float32),  # torch.zeros(1) as in __init__
    }


def _reference(x, params, *, nonlinear=True, use_gamma=True):
    D = params["wq"].shape[1]
    q = x @ params["wq"] + params["bq"]
    k = x @ params["wk"] + params["bk"]
    if nonlinear:
        q, k = jnp.tanh(q), jnp.tanh(k)
    v = x @ params["wv"] + params["bv"]
    score = jnp.einsum("bnd,bmd->bnm", q, k) / np.sqrt(D)
    a = jax.nn.softmax(score, axis=-1)
    ctx = jnp.einsum("bnm,bml->bnl", a, v)
    return params["gamma"][0] * ctx + x if use_gamma else ctx


if __name__ == "__main__":
    B, N, L, D = 2, 8, 32, 16
    key = jax.random.PRNGKey(0)
    kx, kp = jax.random.split(key)

    x = jax.random.normal(kx, (B, N, L), jnp.float32)
    params = _init_params(kp, L, D)

    # Pack once (outside the hot path) -- per perf feedback.
    packed = pack_params(params)

    # 1) gamma as initialized in the module (zeros): out == x exactly.
    out0 = jax.block_until_ready(self_attention(x, packed))
    ref0 = _reference(x, params)
    assert out0.shape == (B, N, L)
    assert np.allclose(np.asarray(out0), np.asarray(ref0), atol=1e-5, rtol=1e-5)

    # 2) nonzero gamma to exercise the full attention + residual path
    #    (exact softmax divide -> tight tolerance).
    params_g = dict(params, gamma=jnp.full((1,), 0.5, jnp.float32))
    packed_g = pack_params(params_g)
    fwd = jax.jit(self_attention)           # packing already hoisted out of jit
    out1 = jax.block_until_ready(fwd(x, packed_g))
    ref1 = _reference(x, params_g)
    assert np.allclose(np.asarray(out1), np.asarray(ref1), atol=1e-5, rtol=1e-5)

    # 3) same result with a 2-way batch grid (the v7x two-TensorCore variant).
    out2 = jax.block_until_ready(self_attention(x, packed_g, batch_blocks=2))
    assert np.allclose(np.asarray(out2), np.asarray(ref1), atol=1e-5, rtol=1e-5)

    print("KERNEL_OK")
</pallas_src>

<mosaic_0001>
module attributes {stable_mosaic.version = 11 : i64} {
  func.func @_self_attention_kernel(%arg0: i32, %arg1: memref<2x8x32xf32, #tpu.memory_space<vmem>>, %arg2: memref<32x64xf32, #tpu.memory_space<vmem>>, %arg3: memref<1x64xf32, #tpu.memory_space<vmem>>, %arg4: memref<1xf32, #tpu.memory_space<smem>>, %arg5: memref<2x8x32xf32, #tpu.memory_space<vmem>>) attributes {dimension_semantics = [#tpu.dimension_semantics<parallel>], iteration_bounds = array<i64: 1>, scalar_prefetch = 0 : i64, scratch_operands = 0 : i64, tpu.core_type = #tpu.core_type<tc>, window_params = [{transform_indices = @transform_0, window_bounds = array<i64: 2, 8, 32>}, {pipeline_mode = #tpu.pipeline_mode<synchronous>, transform_indices = @transform_1, window_bounds = array<i64: 32, 64>}, {pipeline_mode = #tpu.pipeline_mode<synchronous>, transform_indices = @transform_2, window_bounds = array<i64: 1, 64>}, {transform_indices = @transform_3, window_bounds = array<i64: 1>}, {transform_indices = @transform_4, window_bounds = array<i64: 2, 8, 32>}]} {
    %c0 = arith.constant 0 : index
    %c0_0 = arith.constant 0 : index
    %c0_1 = arith.constant 0 : index
    %0 = vector.load %arg1[%c0, %c0_0, %c0_1] : memref<2x8x32xf32, #tpu.memory_space<vmem>>, vector<2x8x32xf32>
    %1 = vector.shape_cast %0 : vector<2x8x32xf32> to vector<16x32xf32>
    %c0_2 = arith.constant 0 : index
    %c0_3 = arith.constant 0 : index
    %2 = vector.load %arg2[%c0_2, %c0_3] : memref<32x64xf32, #tpu.memory_space<vmem>>, vector<32x64xf32>
    %cst = arith.constant dense<0.000000e+00> : vector<16x64xf32>
    %3 = tpu.matmul %1, %2, %cst {dimension_numbers = #tpu.dot_dimension_numbers<[1], [0], [0], [1], [0, 0, 1, 1], [], []>} : vector<16x32xf32>, vector<32x64xf32>, vector<16x64xf32> -> vector<16x64xf32>
    %c0_4 = arith.constant 0 : index
    %c0_5 = arith.constant 0 : index
    %4 = vector.load %arg3[%c0_4, %c0_5] : memref<1x64xf32, #tpu.memory_space<vmem>>, vector<1x64xf32>
    %5 = vector.broadcast %4 : vector<1x64xf32> to vector<16x64xf32>
    %6 = arith.addf %3, %5 : vector<16x64xf32>
    %7 = vector.extract_strided_slice %6 {offsets = [0, 0], sizes = [16, 16], strides = [1, 1]} : vector<16x64xf32> to vector<16x16xf32>
    %8 = vector.extract_strided_slice %6 {offsets = [0, 16], sizes = [16, 16], strides = [1, 1]} : vector<16x64xf32> to vector<16x16xf32>
    %9 = vector.extract_strided_slice %6 {offsets = [0, 32], sizes = [16, 32], strides = [1, 1]} : vector<16x64xf32> to vector<16x32xf32>
    %10 = math.tanh %7 : vector<16x16xf32>
    %11 = math.tanh %8 : vector<16x16xf32>
    %12 = vector.shape_cast %10 : vector<16x16xf32> to vector<2x8x16xf32>
    %13 = vector.shape_cast %11 : vector<16x16xf32> to vector<2x8x16xf32>
    %14 = vector.shape_cast %9 : vector<16x32xf32> to vector<2x8x32xf32>
    %cst_6 = arith.constant dense<0.000000e+00> : vector<2x8x8xf32>
    %15 = tpu.matmul %12, %13, %cst_6 {dimension_numbers = #tpu.dot_dimension_numbers<[2], [2], [1], [1], [0, 0, 0, 1, 1, 1], [0], [0]>} : vector<2x8x16xf32>, vector<2x8x16xf32>, vector<2x8x8xf32> -> vector<2x8x8xf32>
    %cst_7 = arith.constant 2.500000e-01 : f32
    %16 = vector.broadcast %cst_7 : f32 to vector<2x8x8xf32>
    %17 = arith.mulf %15, %16 : vector<2x8x8xf32>
    %cst_8 = arith.constant dense<0xFF800000> : vector<2x8xf32>
    %18 = vector.multi_reduction <maximumf>, %17, %cst_8 [2] : vector<2x8x8xf32> to vector<2x8xf32>
    %19 = vector.shape_cast %18 : vector<2x8xf32> to vector<2x8x1xf32>
    %20 = vector.broadcast %19 : vector<2x8x1xf32> to vector<2x8x8xf32>
    %21 = arith.subf %17, %20 : vector<2x8x8xf32>
    %22 = math.exp %21 : vector<2x8x8xf32>
    %cst_9 = arith.constant dense<0.000000e+00> : vector<2x8xf32>
    %23 = vector.multi_reduction <add>, %22, %cst_9 [2] : vector<2x8x8xf32> to vector<2x8xf32>
    %24 = vector.shape_cast %23 : vector<2x8xf32> to vector<2x8x1xf32>
    %25 = vector.broadcast %24 : vector<2x8x1xf32> to vector<2x8x8xf32>
    %26 = arith.divf %22, %25 : vector<2x8x8xf32>
    %cst_10 = arith.constant dense<0.000000e+00> : vector<2x8x32xf32>
    %27 = tpu.matmul %26, %14, %cst_10 {dimension_numbers = #tpu.dot_dimension_numbers<[2], [1], [1], [2], [0, 0, 0, 1, 1, 2], [0], [0]>} : vector<2x8x8xf32>, vector<2x8x32xf32>, vector<2x8x32xf32> -> vector<2x8x32xf32>
    %c0_11 = arith.constant 0 : index
    %28 = memref.load %arg4[%c0_11] : memref<1xf32, #tpu.memory_space<smem>>
    %29 = vector.broadcast %28 : f32 to vector<2x8x32xf32>
    %30 = arith.mulf %29, %27 : vector<2x8x32xf32>
    %31 = arith.addf %30, %0 : vector<2x8x32xf32>
    %c0_12 = arith.constant 0 : index
    %c0_13 = arith.constant 0 : index
    %c0_14 = arith.constant 0 : index
    %32 = vector.load %arg5[%c0_12, %c0_13, %c0_14] : memref<2x8x32xf32, #tpu.memory_space<vmem>>, vector<2x8x32xf32>
    tpu.vector_store %arg5[%c0_12, %c0_13, %c0_14], %31 {strides = array<i32>} : memref<2x8x32xf32, #tpu.memory_space<vmem>>, vector<2x8x32xf32>,
    return
  }
  func.func @transform_0(%arg0: i32) -> (i32, i32, i32) {
    %c0_i32 = arith.constant 0 : i32
    %c0_i32_0 = arith.constant 0 : i32
    %c0_i32_1 = arith.constant 0 : i32
    return %arg0, %c0_i32, %c0_i32_0 : i32, i32, i32
  }
  func.func @transform_1(%arg0: i32) -> (i32, i32) {
    %c0_i32 = arith.constant 0 : i32
    %c0_i32_0 = arith.constant 0 : i32
    %c0_i32_1 = arith.constant 0 : i32
    return %c0_i32, %c0_i32_0 : i32, i32
  }
  func.func @transform_2(%arg0: i32) -> (i32, i32) {
    %c0_i32 = arith.constant 0 : i32
    %c0_i32_0 = arith.constant 0 : i32
    %c0_i32_1 = arith.constant 0 : i32
    return %c0_i32, %c0_i32_0 : i32, i32
  }
  func.func @transform_3(%arg0: i32) -> i32 {
    %c0_i32 = arith.constant 0 : i32
    %c0_i32_0 = arith.constant 0 : i32
    return %c0_i32 : i32
  }
  func.func @transform_4(%arg0: i32) -> (i32, i32, i32) {
    %c0_i32 = arith.constant 0 : i32
    %c0_i32_0 = arith.constant 0 : i32
    %c0_i32_1 = arith.constant 0 : i32
    return %arg0, %c0_i32, %c0_i32_0 : i32, i32, i32
  }
}

</mosaic_0001>

<llo_original>
// kernel: tpu_custom_call.1
$region0: #{tpu_custom_call.1}
  #allocation0 [shape = 'u32[]', space=smem, size = 0x4, offset = 0x4, fixed_abs, tag = 'smem constant byte address 0x4 - core index']
  #allocation1 [shape = 'u32[144,128]{1,0:T(1,128)}', space=vmem, size = 0x12000, scoped, tag = 'internal scratch']
  #allocation2 [shape = 'f32[1]{0:T(128)S(6)}', space=smem, size = 0x200, scoped, tag = 'scoped memory for tpu_custom_call.1']
  %s0 = inlined_call_operand.hbm [shape: f32[2,8,32], index: 0, kind: input, shape index: {}]
  %s1 = inlined_call_operand.hbm [shape: f32[32,64], index: 1, kind: input, shape index: {}]
  %s2 = inlined_call_operand.vmem [shape: f32[1,64], index: 2, kind: input, shape index: {}]
  %s3 = inlined_call_operand.<no memory space> [shape: f32[1], index: 3, kind: input, shape index: {}]
  %s4 = inlined_call_operand.hbm [shape: f32[2,8,32], index: 4, kind: output, shape index: {}]
  %s5 = sld [smem:[#allocation0]]
  $region34: #{tpu_custom_call.1} parent=0
    _
  %s7 = ssub.s32 1, %s5
  %s8 = scalar_select 0, %s7, %s5
  %9 = sst [smem:[#allocation2]] %s3
  $region1: #{tpu_custom_call.1} parent=0
    #allocation3 [shape = 'u8[8192]{0}', space=vmem, size = 0x2000, scoped, tag = 'input window, operand 0, single buffered']
    #allocation4 [shape = 's32[1]{0}', space=sflag, size = 0x4, scoped, tag = 'scoped memory for tpu_custom_call.1']
    #allocation5 [shape = 's32[1]{0}', space=sflag, size = 0x4, scoped, tag = 'scoped memory for tpu_custom_call.1']
    #allocation6 [shape = 'u8[16384]{0}', space=vmem, size = 0x4000, scoped, tag = 'input window, operand 1, single buffered']
    #allocation7 [shape = 's32[1]{0}', space=sflag, size = 0x4, scoped, tag = 'scoped memory for tpu_custom_call.1']
    #allocation8 [shape = 'u8[8192]{0}', space=vmem, size = 0x2000, scoped, tag = 'output window, operand 0, single buffered']
    %10 = vsyncpa [#allocation4], 0
    %11 = vsyncpa [#allocation7], 0
    %12 = vsyncpa [#allocation5], 0
    // Predicated region
    $region2: #{tpu_custom_call.1} parent=1 // pred_check
      _
    $region3: #{tpu_custom_call.1} parent=1 // pred_check_branch
      %14 = sbr.rel (0) target = $region5
    $region4: #{tpu_custom_call.1} parent=1 // pred_region
      %s16 = ssub.s32 256, 256
      %17 = vsyncadd [#allocation4], %s16
      %s18 = sshll.u32 [#allocation3], 4
      %s19 = int_to_ptr.vmem [resolvable:$true] %s18
      %24 = dma.hbm_to_vmem [thread:$0]  %s0, 256, %s19, [#allocation4], 128, 128, 8
    $region5: #{tpu_custom_call.1} parent=1 // pred_fallthru
      _
    // Predicated region
    $region6: #{tpu_custom_call.1} parent=1 // pred_check
      _
    $region7: #{tpu_custom_call.1} parent=1 // pred_check_branch
      %26 = sbr.rel (0) target = $region9
    $region8: #{tpu_custom_call.1} parent=1 // pred_region
      %s28 = ssub.s32 512, 512
      %29 = vsyncadd [#allocation7], %s28
      %s30 = sshll.u32 [#allocation6], 4
      %s31 = int_to_ptr.vmem [resolvable:$true] %s30
      %36 = dma.hbm_to_vmem [thread:$0]  %s1, 512, %s31, [#allocation7], 128, 128, 8
    $region9: #{tpu_custom_call.1} parent=1 // pred_fallthru
      _
    // Predicated region
    $region10: #{tpu_custom_call.1} parent=1 // pred_check
      _
    $region11: #{tpu_custom_call.1} parent=1 // pred_check_branch
      %38 = sbr.rel (0) target = $region13
    $region12: #{tpu_custom_call.1} parent=1 // pred_region
      _
    $region13: #{tpu_custom_call.1} parent=1 // pred_fallthru
      _
    // Predicated region
    $region14: #{tpu_custom_call.1} parent=1 // pred_check
      _
    $region15: #{tpu_custom_call.1} parent=1 // pred_check_branch
      %40 = sbr.rel (0) target = $region17
    $region16: #{tpu_custom_call.1} parent=1 // pred_region
      _
    $region17: #{tpu_custom_call.1} parent=1 // pred_fallthru
      _
    // Predicated region
    $region18: #{tpu_custom_call.1} parent=1 // pred_check
      _
    $region19: #{tpu_custom_call.1} parent=1 // pred_check_branch
      %42 = sbr.rel (0) target = $region21
    $region20: #{tpu_custom_call.1} parent=1 // pred_region
      %43 = dma.done [#allocation4], 256
    $region21: #{tpu_custom_call.1} parent=1 // pred_fallthru
      _
    // Predicated region
    $region22: #{tpu_custom_call.1} parent=1 // pred_check
      _
    $region23: #{tpu_custom_call.1} parent=1 // pred_check_branch
      %45 = sbr.rel (0) target = $region25
    $region24: #{tpu_custom_call.1} parent=1 // pred_region
      %46 = dma.done [#allocation7], 512
    $region25: #{tpu_custom_call.1} parent=1 // pred_fallthru
      _
    %v47 = vld [vmem:[#allocation3] sm:$0xff]
    %v48 = vld [vmem:[#allocation3 + $0x8] sm:$0xff]
    %v49 = vld [vmem:[#allocation6] sm:$0xff]
    %v50 = vld [vmem:[#allocation6 + $0x8] sm:$0xff]
    %v51 = vld [vmem:[#allocation6 + $0x10] sm:$0xff]
    %v52 = vld [vmem:[#allocation6 + $0x18] sm:$0xff]
    %v53 = vld [vmem:[%s2] sm:$0x1]
    %v55 = vlaneseq
    %v56 = vshrl.u32 %v55, 7
    %v57 = vsub.s32 0, %v56
    %v58 = vrot.slane %v53, %v57
    %vm60 = vcmask 261120
    %v62 = vsel %vm60, %v47, 0
    %v65 = vsel %vm60, %v48, 0
    %67 = vmatprep.subr.mxu0 0.0
    %68 = vmatpush1.msra.mxu0 %v49
    %69 = vmatprep.subr.mxu0 0.0
    %70 = vmatpush1.msra.mxu0 %v50
    %71 = vmatprep.subr.mxu0 0.0
    %72 = vmatpush1.msra.mxu0 %v51
    %73 = vmatprep.subr.mxu0 0.0
    %74 = vmatpush1.msra.mxu0 %v52
    %75 = vmatprep.subr.mxu0 0.0
    %76 = vmatpush1.msra.mxu0 0.0
    %77 = vmatprep.subr.mxu0 0.0
    %78 = vmatpush1.msra.mxu0 0.0
    %79 = vmatprep.subr.mxu0 0.0
    %80 = vmatpush1.msra.mxu0 0.0
    %81 = vmatprep.subr.mxu0 0.0
    %82 = vmatpush1.msra.mxu0 0.0
    %83 = vmatprep.subr.mxu0 0.0
    %84 = vmatpush1.msra.mxu0 0.0
    %85 = vmatprep.subr.mxu0 0.0
    %86 = vmatpush1.msra.mxu0 0.0
    %87 = vmatprep.subr.mxu0 0.0
    %88 = vmatpush1.msra.mxu0 0.0
    %89 = vmatprep.subr.mxu0 0.0
    %90 = vmatpush1.msra.mxu0 0.0
    %91 = vmatprep.subr.mxu0 0.0
    %92 = vmatpush1.msra.mxu0 0.0
    %93 = vmatprep.subr.mxu0 0.0
    %94 = vmatpush1.msra.mxu0 0.0
    %95 = vmatprep.subr.mxu0 0.0
    %96 = vmatpush1.msra.mxu0 0.0
    %97 = vmatprep.subr.mxu0 0.0
    %98 = vmatpush1.msra.mxu0 0.0
    %99 = vmatprep.subr.mxu0 0.0
    %100 = vmatpush1.msra.mxu0 0.0
    %101 = vmatprep.subr.mxu0 0.0
    %102 = vmatpush1.msra.mxu0 0.0
    %103 = vmatprep.subr.mxu0 0.0
    %104 = vmatpush1.msra.mxu0 0.0
    %105 = vmatprep.subr.mxu0 0.0
    %106 = vmatpush1.msra.mxu0 0.0
    %107 = vmatprep.subr.mxu0 0.0
    %108 = vmatpush1.msra.mxu0 0.0
    %109 = vmatprep.subr.mxu0 0.0
    %110 = vmatpush1.msra.mxu0 0.0
    %111 = vmatprep.subr.mxu0 0.0
    %112 = vmatpush1.msra.mxu0 0.0
    %113 = vmatprep.subr.mxu0 0.0
    %114 = vmatpush1.msra.mxu0 0.0
    %115 = vmatprep.subr.mxu0 0.0
    %116 = vmatpush1.msra.mxu0 0.0
    %117 = vmatprep.subr.mxu0 0.0
    %118 = vmatpush1.msra.mxu0 0.0
    %119 = vmatprep.subr.mxu0 0.0
    %120 = vmatpush1.msra.mxu0 0.0
    %121 = vmatprep.subr.mxu0 0.0
    %122 = vmatpush1.msra.mxu0 0.0
    %123 = vmatprep.subr.mxu0 0.0
    %124 = vmatpush1.msra.mxu0 0.0
    %125 = vmatprep.subr.mxu0 0.0
    %126 = vmatpush1.msra.mxu0 0.0
    %127 = vmatprep.subr.mxu0 0.0
    %128 = vmatpush1.msra.mxu0 0.0
    %129 = vmatprep.subr.mxu0 0.0
    %130 = vmatpush1.msra.mxu0 0.0
    %131 = vmatprep.mubr.f32.mxu0 0.0
    %132 = vmatmul.mubr.f32.gmra.mrb[0].mxu0 %v62
    %v133 = vpop.f32.mrb[0].mxu0
    %v134 = vadd.f32 %v58, %v133
    %v135 = vpop.f32.mrb[0].mxu0
    %136 = vmatprep.mubr.f32.mxu0 0.0
    %137 = vmatmul.mubr.f32.gmra.mrb[0].mxu0 %v65
    %v138 = vpop.f32.mrb[0].mxu0
    %v139 = vadd.f32 %v58, %v138
    %v140 = vpop.f32.mrb[0].mxu0
    %141 = vdwg.mxu0
    %v142 = vtanh.pop %v134
    %v143 = vtanh.pop %v139
    %145 = vrot.lane.b32.xlu0 %v142, 112
    %v146 = vpop.permute.xlu0 %145
    %vm147 = vcmask 130048
    %v148 = vsel %vm147, %v142, 0
    %v150 = vsel %vm147, %v146, 0
    %152 = vmatprep.subr.mxu0 0.0
    %153 = vmatpush1.xpose.msra.mxu0 %v150
    %154 = vmatprep.subr.mxu0 0.0
    %155 = vmatpush1.xpose.msra.mxu0 0.0
    %156 = vmatprep.subr.mxu0 0.0
    %157 = vmatpush1.xpose.msra.mxu0 0.0
    %158 = vmatprep.subr.mxu0 0.0
    %159 = vmatpush1.xpose.msra.mxu0 0.0
    %160 = vmatprep.subr.mxu0 0.0
    %161 = vmatpush1.xpose.msra.mxu0 0.0
    %162 = vmatprep.subr.mxu0 0.0
    %163 = vmatpush1.xpose.msra.mxu0 0.0
    %164 = vmatprep.subr.mxu0 0.0
    %165 = vmatpush1.xpose.msra.mxu0 0.0
    %166 = vmatprep.subr.mxu0 0.0
    %167 = vmatpush1.xpose.msra.mxu0 0.0
    %168 = vmatprep.subr.mxu0 0.0
    %169 = vmatpush1.xpose.msra.mxu0 0.0
    %170 = vmatprep.subr.mxu0 0.0
    %171 = vmatpush1.xpose.msra.mxu0 0.0
    %172 = vmatprep.subr.mxu0 0.0
    %173 = vmatpush1.xpose.msra.mxu0 0.0
    %174 = vmatprep.subr.mxu0 0.0
    %175 = vmatpush1.xpose.msra.mxu0 0.0
    %176 = vmatprep.subr.mxu0 0.0
    %177 = vmatpush1.xpose.msra.mxu0 0.0
    %178 = vmatprep.subr.mxu0 0.0
    %179 = vmatpush1.xpose.msra.mxu0 0.0
    %180 = vmatprep.subr.mxu0 0.0
    %181 = vmatpush1.xpose.msra.mxu0 0.0
    %182 = vmatprep.subr.mxu0 0.0
    %183 = vmatpush1.xpose.msra.mxu0 0.0
    %184 = vmatprep.subr.mxu0 0.0
    %185 = vmatpush1.xpose.msra.mxu0 0.0
    %186 = vmatprep.subr.mxu0 0.0
    %187 = vmatpush1.xpose.msra.mxu0 0.0
    %188 = vmatprep.subr.mxu0 0.0
    %189 = vmatpush1.xpose.msra.mxu0 0.0
    %190 = vmatprep.subr.mxu0 0.0
    %191 = vmatpush1.xpose.msra.mxu0 0.0
    %192 = vmatprep.subr.mxu0 0.0
    %193 = vmatpush1.xpose.msra.mxu0 0.0
    %194 = vmatprep.subr.mxu0 0.0
    %195 = vmatpush1.xpose.msra.mxu0 0.0
    %196 = vmatprep.subr.mxu0 0.0
    %197 = vmatpush1.xpose.msra.mxu0 0.0
    %198 = vmatprep.subr.mxu0 0.0
    %199 = vmatpush1.xpose.msra.mxu0 0.0
    %200 = vmatprep.subr.mxu0 0.0
    %201 = vmatpush1.xpose.msra.mxu0 0.0
    %202 = vmatprep.subr.mxu0 0.0
    %203 = vmatpush1.xpose.msra.mxu0 0.0
    %204 = vmatprep.subr.mxu0 0.0
    %205 = vmatpush1.xpose.msra.mxu0 0.0
    %206 = vmatprep.subr.mxu0 0.0
    %207 = vmatpush1.xpose.msra.mxu0 0.0
    %208 = vmatprep.subr.mxu0 0.0
    %209 = vmatpush1.xpose.msra.mxu0 0.0
    %210 = vmatprep.subr.mxu0 0.0
    %211 = vmatpush1.xpose.msra.mxu0 0.0
    %212 = vmatprep.subr.mxu0 0.0
    %213 = vmatpush1.xpose.msra.mxu0 0.0
    %214 = vmatprep.subr.mxu0 0.0
    %215 = vmatpush1.xpose.msra.mxu0 0.0
    %216 = vmatprep.mubr.f32.mxu0 0.0
    %217 = vmatmul.mubr.f32.gmra.mrb[0].mxu0 %v148
    %v218 = vpop.f32.mrb[0].mxu0
    %v219 = vadd.f32 0.0, %v218
    %v220 = vpop.f32.mrb[0].mxu0
    %221 = vdwg.mxu0
    %223 = vrot.lane.b32.xlu0 %v143, 112
    %v224 = vpop.permute.xlu0 %223
    %v225 = vsel %vm147, %v143, 0
    %v227 = vsel %vm147, %v224, 0
    %229 = vmatprep.subr.mxu0 0.0
    %230 = vmatpush1.xpose.msra.mxu0 %v227
    %231 = vmatprep.subr.mxu0 0.0
    %232 = vmatpush1.xpose.msra.mxu0 0.0
    %233 = vmatprep.subr.mxu0 0.0
    %234 = vmatpush1.xpose.msra.mxu0 0.0
    %235 = vmatprep.subr.mxu0 0.0
    %236 = vmatpush1.xpose.msra.mxu0 0.0
    %237 = vmatprep.subr.mxu0 0.0
    %238 = vmatpush1.xpose.msra.mxu0 0.0
    %239 = vmatprep.subr.mxu0 0.0
    %240 = vmatpush1.xpose.msra.mxu0 0.0
    %241 = vmatprep.subr.mxu0 0.0
    %242 = vmatpush1.xpose.msra.mxu0 0.0
    %243 = vmatprep.subr.mxu0 0.0
    %244 = vmatpush1.xpose.msra.mxu0 0.0
    %245 = vmatprep.subr.mxu0 0.0
    %246 = vmatpush1.xpose.msra.mxu0 0.0
    %247 = vmatprep.subr.mxu0 0.0
    %248 = vmatpush1.xpose.msra.mxu0 0.0
    %249 = vmatprep.subr.mxu0 0.0
    %250 = vmatpush1.xpose.msra.mxu0 0.0
    %251 = vmatprep.subr.mxu0 0.0
    %252 = vmatpush1.xpose.msra.mxu0 0.0
    %253 = vmatprep.subr.mxu0 0.0
    %254 = vmatpush1.xpose.msra.mxu0 0.0
    %255 = vmatprep.subr.mxu0 0.0
    %256 = vmatpush1.xpose.msra.mxu0 0.0
    %257 = vmatprep.subr.mxu0 0.0
    %258 = vmatpush1.xpose.msra.mxu0 0.0
    %259 = vmatprep.subr.mxu0 0.0
    %260 = vmatpush1.xpose.msra.mxu0 0.0
    %261 = vmatprep.subr.mxu0 0.0
    %262 = vmatpush1.xpose.msra.mxu0 0.0
    %263 = vmatprep.subr.mxu0 0.0
    %264 = vmatpush1.xpose.msra.mxu0 0.0
    %265 = vmatprep.subr.mxu0 0.0
    %266 = vmatpush1.xpose.msra.mxu0 0.0
    %267 = vmatprep.subr.mxu0 0.0
    %268 = vmatpush1.xpose.msra.mxu0 0.0
    %269 = vmatprep.subr.mxu0 0.0
    %270 = vmatpush1.xpose.msra.mxu0 0.0
    %271 = vmatprep.subr.mxu0 0.0
    %272 = vmatpush1.xpose.msra.mxu0 0.0
    %273 = vmatprep.subr.mxu0 0.0
    %274 = vmatpush1.xpose.msra.mxu0 0.0
    %275 = vmatprep.subr.mxu0 0.0
    %276 = vmatpush1.xpose.msra.mxu0 0.0
    %277 = vmatprep.subr.mxu0 0.0
    %278 = vmatpush1.xpose.msra.mxu0 0.0
    %279 = vmatprep.subr.mxu0 0.0
    %280 = vmatpush1.xpose.msra.mxu0 0.0
    %281 = vmatprep.subr.mxu0 0.0
    %282 = vmatpush1.xpose.msra.mxu0 0.0
    %283 = vmatprep.subr.mxu0 0.0
    %284 = vmatpush1.xpose.msra.mxu0 0.0
    %285 = vmatprep.subr.mxu0 0.0
    %286 = vmatpush1.xpose.msra.mxu0 0.0
    %287 = vmatprep.subr.mxu0 0.0
    %288 = vmatpush1.xpose.msra.mxu0 0.0
    %289 = vmatprep.subr.mxu0 0.0
    %290 = vmatpush1.xpose.msra.mxu0 0.0
    %291 = vmatprep.subr.mxu0 0.0
    %292 = vmatpush1.xpose.msra.mxu0 0.0
    %293 = vmatprep.mubr.f32.mxu0 0.0
    %294 = vmatmul.mubr.f32.gmra.mrb[0].mxu0 %v225
    %v295 = vpop.f32.mrb[0].mxu0
    %v296 = vadd.f32 0.0, %v295
    %v297 = vpop.f32.mrb[0].mxu0
    %298 = vdwg.mxu0
    %v299 = vmul.f32 %v219, 0.25
    %v300 = vmul.f32 %v296, 0.25
    %vm301 = vcmask 64512
    %v302 = vsel %vm301, %v299, -inf
    %303 = vmax.xlane.f32.xlu0 %v302
    %v304 = vpop.xlane.xlu0 %303
    %v305 = vsel %vm301, %v300, -inf
    %306 = vmax.xlane.f32.xlu0 %v305
    %v307 = vpop.xlane.xlu0 %306
    %v308 = vsub.f32 %v299, %v304
    %v309 = vsub.f32 %v300, %v307
    %v310 = vmul.f32 %v308, 1.442695
    %v311 = vpow.pop %v310
    %v312 = vmul.f32 %v309, 1.442695
    %v313 = vpow.pop %v312
    %v314 = vsel %vm301, %v311, 0.0
    %315 = vadd.xlane.f32.xlu0 %v314
    %v316 = vpop.xlane.xlu0 %315
    %v317 = vsel %vm301, %v313, 0.0
    %318 = vadd.xlane.f32.xlu0 %v317
    %v319 = vpop.xlane.xlu0 %318
    %v320 = vrcp.pop %v316
    %v321 = vmul.f32 %v311, %v320
    %v322 = vrcp.pop %v319
    %v323 = vmul.f32 %v313, %v322
    %325 = vrot.lane.b32.xlu0 %v134, 96
    %v326 = vpop.permute.xlu0 %325
    %v329 = vsel %vm301, %v321, 0
    %331 = vmatprep.subr.mxu0 0.0
    %332 = vmatpush1.msra.mxu0 %v326
    %333 = vmatprep.subr.mxu0 0.0
    %334 = vmatpush1.msra.mxu0 0.0
    %335 = vmatprep.subr.mxu0 0.0
    %336 = vmatpush1.msra.mxu0 0.0
    %337 = vmatprep.subr.mxu0 0.0
    %338 = vmatpush1.msra.mxu0 0.0
    %339 = vmatprep.subr.mxu0 0.0
    %340 = vmatpush1.msra.mxu0 0.0
    %341 = vmatprep.subr.mxu0 0.0
    %342 = vmatpush1.msra.mxu0 0.0
    %343 = vmatprep.subr.mxu0 0.0
    %344 = vmatpush1.msra.mxu0 0.0
    %345 = vmatprep.subr.mxu0 0.0
    %346 = vmatpush1.msra.mxu0 0.0
    %347 = vmatprep.subr.mxu0 0.0
    %348 = vmatpush1.msra.mxu0 0.0
    %349 = vmatprep.subr.mxu0 0.0
    %350 = vmatpush1.msra.mxu0 0.0
    %351 = vmatprep.subr.mxu0 0.0
    %352 = vmatpush1.msra.mxu0 0.0
    %353 = vmatprep.subr.mxu0 0.0
    %354 = vmatpush1.msra.mxu0 0.0
    %355 = vmatprep.subr.mxu0 0.0
    %356 = vmatpush1.msra.mxu0 0.0
    %357 = vmatprep.subr.mxu0 0.0
    %358 = vmatpush1.msra.mxu0 0.0
    %359 = vmatprep.subr.mxu0 0.0
    %360 = vmatpush1.msra.mxu0 0.0
    %361 = vmatprep.subr.mxu0 0.0
    %362 = vmatpush1.msra.mxu0 0.0
    %363 = vmatprep.subr.mxu0 0.0
    %364 = vmatpush1.msra.mxu0 0.0
    %365 = vmatprep.subr.mxu0 0.0
    %366 = vmatpush1.msra.mxu0 0.0
    %367 = vmatprep.subr.mxu0 0.0
    %368 = vmatpush1.msra.mxu0 0.0
    %369 = vmatprep.subr.mxu0 0.0
    %370 = vmatpush1.msra.mxu0 0.0
    %371 = vmatprep.subr.mxu0 0.0
    %372 = vmatpush1.msra.mxu0 0.0
    %373 = vmatprep.subr.mxu0 0.0
    %374 = vmatpush1.msra.mxu0 0.0
    %375 = vmatprep.subr.mxu0 0.0
    %376 = vmatpush1.msra.mxu0 0.0
    %377 = vmatprep.subr.mxu0 0.0
    %378 = vmatpush1.msra.mxu0 0.0
    %379 = vmatprep.subr.mxu0 0.0
    %380 = vmatpush1.msra.mxu0 0.0
    %381 = vmatprep.subr.mxu0 0.0
    %382 = vmatpush1.msra.mxu0 0.0
    %383 = vmatprep.subr.mxu0 0.0
    %384 = vmatpush1.msra.mxu0 0.0
    %385 = vmatprep.subr.mxu0 0.0
    %386 = vmatpush1.msra.mxu0 0.0
    %387 = vmatprep.subr.mxu0 0.0
    %388 = vmatpush1.msra.mxu0 0.0
    %389 = vmatprep.subr.mxu0 0.0
    %390 = vmatpush1.msra.mxu0 0.0
    %391 = vmatprep.subr.mxu0 0.0
    %392 = vmatpush1.msra.mxu0 0.0
    %393 = vmatprep.subr.mxu0 0.0
    %394 = vmatpush1.msra.mxu0 0.0
    %395 = vmatprep.mubr.f32.mxu0 0.0
    %396 = vmatmul.mubr.f32.gmra.mrb[0].mxu0 %v329
    %v397 = vpop.f32.mrb[0].mxu0
    %v398 = vadd.f32 0.0, %v397
    %v399 = vpop.f32.mrb[0].mxu0
    %400 = vdwg.mxu0
    %402 = vrot.lane.b32.xlu0 %v139, 96
    %v403 = vpop.permute.xlu0 %402
    %v406 = vsel %vm301, %v323, 0
    %408 = vmatprep.subr.mxu0 0.0
    %409 = vmatpush1.msra.mxu0 %v403
    %410 = vmatprep.subr.mxu0 0.0
    %411 = vmatpush1.msra.mxu0 0.0
    %412 = vmatprep.subr.mxu0 0.0
    %413 = vmatpush1.msra.mxu0 0.0
    %414 = vmatprep.subr.mxu0 0.0
    %415 = vmatpush1.msra.mxu0 0.0
    %416 = vmatprep.subr.mxu0 0.0
    %417 = vmatpush1.msra.mxu0 0.0
    %418 = vmatprep.subr.mxu0 0.0
    %419 = vmatpush1.msra.mxu0 0.0
    %420 = vmatprep.subr.mxu0 0.0
    %421 = vmatpush1.msra.mxu0 0.0
    %422 = vmatprep.subr.mxu0 0.0
    %423 = vmatpush1.msra.mxu0 0.0
    %424 = vmatprep.subr.mxu0 0.0
    %425 = vmatpush1.msra.mxu0 0.0
    %426 = vmatprep.subr.mxu0 0.0
    %427 = vmatpush1.msra.mxu0 0.0
    %428 = vmatprep.subr.mxu0 0.0
    %429 = vmatpush1.msra.mxu0 0.0
    %430 = vmatprep.subr.mxu0 0.0
    %431 = vmatpush1.msra.mxu0 0.0
    %432 = vmatprep.subr.mxu0 0.0
    %433 = vmatpush1.msra.mxu0 0.0
    %434 = vmatprep.subr.mxu0 0.0
    %435 = vmatpush1.msra.mxu0 0.0
    %436 = vmatprep.subr.mxu0 0.0
    %437 = vmatpush1.msra.mxu0 0.0
    %438 = vmatprep.subr.mxu0 0.0
    %439 = vmatpush1.msra.mxu0 0.0
    %440 = vmatprep.subr.mxu0 0.0
    %441 = vmatpush1.msra.mxu0 0.0
    %442 = vmatprep.subr.mxu0 0.0
    %443 = vmatpush1.msra.mxu0 0.0
    %444 = vmatprep.subr.mxu0 0.0
    %445 = vmatpush1.msra.mxu0 0.0
    %446 = vmatprep.subr.mxu0 0.0
    %447 = vmatpush1.msra.mxu0 0.0
    %448 = vmatprep.subr.mxu0 0.0
    %449 = vmatpush1.msra.mxu0 0.0
    %450 = vmatprep.subr.mxu0 0.0
    %451 = vmatpush1.msra.mxu0 0.0
    %452 = vmatprep.subr.mxu0 0.0
    %453 = vmatpush1.msra.mxu0 0.0
    %454 = vmatprep.subr.mxu0 0.0
    %455 = vmatpush1.msra.mxu0 0.0
    %456 = vmatprep.subr.mxu0 0.0
    %457 = vmatpush1.msra.mxu0 0.0
    %458 = vmatprep.subr.mxu0 0.0
    %459 = vmatpush1.msra.mxu0 0.0
    %460 = vmatprep.subr.mxu0 0.0
    %461 = vmatpush1.msra.mxu0 0.0
    %462 = vmatprep.subr.mxu0 0.0
    %463 = vmatpush1.msra.mxu0 0.0
    %464 = vmatprep.subr.mxu0 0.0
    %465 = vmatpush1.msra.mxu0 0.0
    %466 = vmatprep.subr.mxu0 0.0
    %467 = vmatpush1.msra.mxu0 0.0
    %468 = vmatprep.subr.mxu0 0.0
    %469 = vmatpush1.msra.mxu0 0.0
    %470 = vmatprep.subr.mxu0 0.0
    %471 = vmatpush1.msra.mxu0 0.0
    %472 = vmatprep.mubr.f32.mxu0 0.0
    %473 = vmatmul.mubr.f32.gmra.mrb[0].mxu0 %v406
    %v474 = vpop.f32.mrb[0].mxu0
    %v475 = vadd.f32 0.0, %v474
    %v476 = vpop.f32.mrb[0].mxu0
    %477 = vdwg.mxu0
    %s478 = sld [smem:[#allocation2]]
    %v479 = vstv %s478
    %v480 = vmul.f32 %v479, %v398
    %v481 = vmul.f32 %v479, %v475
    %v482 = vadd.f32 %v480, %v47
    %v483 = vadd.f32 %v481, %v48
    %484 = vst.msk [vmem:[#allocation8] sm:$0xff] %vm60, %v482
    %485 = vst.msk [vmem:[#allocation8 + $0x8] sm:$0xff] %vm60, %v483
    // Predicated region
    $region26: #{tpu_custom_call.1} parent=1 // pred_check
      _
    $region27: #{tpu_custom_call.1} parent=1 // pred_check_branch
      %487 = sbr.rel (0) target = $region29
    $region28: #{tpu_custom_call.1} parent=1 // pred_region
      %s489 = ssub.s32 256, 256
      %490 = vsyncadd [#allocation5], %s489
      %s491 = sshll.u32 [#allocation8], 4
      %s492 = int_to_ptr.vmem [resolvable:$true] %s491
      %497 = dma.vmem_to_hbm [thread:$0]  %s492, 256, %s4, [#allocation5], 128, 128, 8
    $region29: #{tpu_custom_call.1} parent=1 // pred_fallthru
      _
    // Predicated region
    $region30: #{tpu_custom_call.1} parent=1 // pred_check
      _
    $region31: #{tpu_custom_call.1} parent=1 // pred_check_branch
      %499 = sbr.rel (0) target = $region33
    $region32: #{tpu_custom_call.1} parent=1 // pred_region
      %500 = dma.done [#allocation5], 256
    $region33: #{tpu_custom_call.1} parent=1 // pred_fallthru
      _
    %501 = vsyncpa [#allocation4], 1
    %502 = vsyncpa [#allocation7], 1
    %503 = vsyncpa [#allocation5], 1

</llo_original>
